<compile_context>
chip_gen: v5e
topology: v5e:2x2
jax: 0.10.0
libtpu: 0.0.40
codegen_flags: <defaults>
</compile_context>

<pallas_src>
import functools

import jax
import jax.numpy as jnp
import numpy as np
from jax.experimental import pallas as pl
from jax.experimental.pallas import tpu as pltpu

EPS = 1e-5
_VMEM_LIMIT = 48 * 1024 * 1024          # leaves headroom on v7x (64 MiB VMEM)


# ----------------------------------------------------------------------------
# Frozen-BN folding: y = scale * x + bias; scale is folded into conv weights.
# ----------------------------------------------------------------------------
def _bn_fold(gamma, beta, mean, var):
    scale = gamma / jnp.sqrt(var + EPS)
    bias = beta - mean * scale
    return scale, bias


# ----------------------------------------------------------------------------
# Kernel 1: conv1 (1x1, BN scale pre-folded into w) + bias + ReLU.
# x2d: [M, Cin]  w: [Cin, Cout]  b: [1, Cout]  -> out: [M, Cout]
# Tiled over M for software pipelining / bounded VMEM.
# ----------------------------------------------------------------------------
def _conv1x1_bias_kernel(x_ref, w_ref, b_ref, o_ref, *, relu):
    y = jnp.dot(x_ref[...], w_ref[...], preferred_element_type=jnp.float32)
    y = y + b_ref[...]
    if relu:
        y = jnp.maximum(y, 0.0)
    o_ref[...] = y.astype(o_ref.dtype)


def _pick_m_tile(M, Cin, Cout, itemsize, budget=16 * 1024 * 1024):
    """Largest multiple-of-8 row tile whose double-buffered blocks fit budget."""
    if M <= 256:
        return M                                   # full dim -> always legal
    tm = min(M, 2048)
    tm -= tm % 8
    while tm > 256:
        need = (2 * tm * (Cin + Cout) * itemsize   # in/out blocks, x2 buffers
                + 2 * Cin * Cout * itemsize)       # weight block
        if need <= budget:
            break
        tm //= 2
        tm -= tm % 8
    return max(tm, 8)


def conv1x1_bn(x2d, w, b, *, relu, out_dtype, m_tile=None):
    M, Cin = x2d.shape
    Cout = w.shape[1]
    if m_tile is None:
        m_tile = _pick_m_tile(M, Cin, Cout, x2d.dtype.itemsize)
    tm = min(m_tile, M)                 # tm is full M or a multiple of 8
    return pl.pallas_call(
        functools.partial(_conv1x1_bias_kernel, relu=relu),
        out_shape=jax.ShapeDtypeStruct((M, Cout), out_dtype),
        grid=(pl.cdiv(M, tm),),
        in_specs=[
            pl.BlockSpec((tm, Cin), lambda i: (i, 0)),
            pl.BlockSpec((Cin, Cout), lambda i: (0, 0)),
            pl.BlockSpec((1, Cout), lambda i: (0, 0)),
        ],
        out_specs=pl.BlockSpec((tm, Cout), lambda i: (i, 0)),
        compiler_params=pltpu.CompilerParams(
            dimension_semantics=("parallel",),
            vmem_limit_bytes=_VMEM_LIMIT),
    )(x2d, w, b)


# ----------------------------------------------------------------------------
# Kernel 2 (fused): conv2 (3x3, dilated, stride 1, BN2 scale folded) + bias2 +
# ReLU + conv3 (1x1, BN3 scale folded) + bias3, row-tiled with a halo.
#   x tile : [1, 1, TH+2d, W+2d, C]   w2: [9, C, C]   w3: [C, Cout]
#   out    : [1, TH, W, Cout]
# ----------------------------------------------------------------------------
def _conv3x3_conv1x1_kernel(x_ref, w2_ref, b2_ref, w3_ref, b3_ref, o_ref,
                            acc_ref, *, TH, W, d, mm_dtype):
    C = w2_ref.shape[-1]
    # 3x3 dilated conv as 9 shifted [TH*W, C] x [C, C] MXU matmuls, accumulated
    # in a bounded f32 VMEM scratch (no full-image live accumulator / spills).
    for tap in range(9):
        dy, dx = divmod(tap, 3)
        patch = x_ref[0, 0, dy * d:dy * d + TH, dx * d:dx * d + W, :]
        contrib = jnp.dot(patch.reshape(TH * W, C), w2_ref[tap],
                          preferred_element_type=jnp.float32)
        if tap == 0:
            acc_ref[...] = contrib
        else:
            acc_ref[...] += contrib
    # bn2 bias + ReLU, then conv3 + bn3 bias fused in the epilogue (saves a
    # full HBM write+read of the mid activation and one pallas_call).
    y = jnp.maximum(acc_ref[...] + b2_ref[...], 0.0)
    z = jnp.dot(y.astype(mm_dtype), w3_ref[...],
                preferred_element_type=jnp.float32)
    z = z + b3_ref[...]
    o_ref[0] = z.reshape(TH, W, -1).astype(o_ref.dtype)


def _pick_row_tile(H, Wp, W, C, Cout, d, in_bytes, out_bytes,
                   budget=16 * 1024 * 1024):
    th = H
    while th > 8:
        need = (2 * (th + 2 * d) * Wp * C * in_bytes   # input block (x2 bufs)
                + 2 * th * W * Cout * out_bytes        # output block (x2 bufs)
                + th * W * C * 4)                      # f32 accumulator scratch
        if need <= budget:
            break
        th = (th + 1) // 2
    return max(th, 1)


def conv3x3_conv1x1_bn(y_nhwc, w2f, b2, w3f, b3, *, dilation, out_dtype,
                       row_tile=None):
    N, H, W, C = y_nhwc.shape
    Cout = w3f.shape[-1]
    d = dilation
    Wp = W + 2 * d

    if row_tile is None:
        row_tile = _pick_row_tile(H, Wp, W, C, Cout, d,
                                  y_nhwc.dtype.itemsize,
                                  jnp.dtype(out_dtype).itemsize)
    th = min(row_tile, H)
    n_tiles = pl.cdiv(H, th)
    ht = n_tiles * th

    # Pad once for the fused kernel (d halo + bottom pad so row tiles divide).
    # TODO(synk): for very large activations, replace this materialized halo
    # with manual overlapping-window DMA (memory_space=pl.ANY) to avoid the
    # extra HBM pass over the mid activation.
    xp = jnp.pad(y_nhwc, ((0, 0), (d, d + ht - H), (d, d), (0, 0)))
    if n_tiles == 1:
        xt = xp[:, None]                                   # no duplication
    else:
        xt = jnp.stack(
            [xp[:, t * th:t * th + th + 2 * d] for t in range(n_tiles)],
            axis=1)                                        # [N, T, th+2d, Wp, C]

    w2r = w2f.reshape(9, C, C)

    out = pl.pallas_call(
        functools.partial(_conv3x3_conv1x1_kernel, TH=th, W=W, d=d,
                          mm_dtype=w3f.dtype),
        out_shape=jax.ShapeDtypeStruct((N, ht, W, Cout), out_dtype),
        grid=(N, n_tiles),
        in_specs=[
            pl.BlockSpec((1, 1, th + 2 * d, Wp, C),
                         lambda n, t: (n, t, 0, 0, 0)),
            pl.BlockSpec((9, C, C), lambda n, t: (0, 0, 0)),
            pl.BlockSpec((1, C), lambda n, t: (0, 0)),
            pl.BlockSpec((C, Cout), lambda n, t: (0, 0)),
            pl.BlockSpec((1, Cout), lambda n, t: (0, 0)),
        ],
        out_specs=pl.BlockSpec((1, th, W, Cout), lambda n, t: (n, t, 0, 0)),
        scratch_shapes=[pltpu.VMEM((th * W, C), jnp.float32)],
        compiler_params=pltpu.CompilerParams(
            dimension_semantics=("parallel", "parallel"),
            vmem_limit_bytes=_VMEM_LIMIT),
    )(xt, w2r, b2, w3f, b3)
    return out[:, :H] if ht != H else out


# ----------------------------------------------------------------------------
# Parameters (deterministic synthetic init mirroring the PyTorch shapes).
# ----------------------------------------------------------------------------
def _bn_params(key, c):
    k1, k2, k3, k4 = jax.random.split(key, 4)
    gamma = jax.random.uniform(k1, (c,), jnp.float32, 0.5, 1.5)
    beta = jax.random.normal(k2, (c,), jnp.float32) * 0.1
    mean = jax.random.normal(k3, (c,), jnp.float32) * 0.1
    var = jax.random.uniform(k4, (c,), jnp.float32, 0.5, 1.5)
    return gamma, beta, mean, var


def init_bottleneck_params(key, inplanes, planes, expansion=4):
    ks = jax.random.split(key, 6)
    return dict(
        # conv1: PyTorch (planes, inplanes, 1, 1) -> stored (Cin, Cout)
        w1=jax.random.normal(ks[0], (inplanes, planes), jnp.float32) * 0.1,
        bn1=_bn_params(ks[1], planes),
        # conv2: PyTorch (planes, planes, 3, 3) -> stored HWIO (3, 3, Cin, Cout)
        w2=jax.random.normal(ks[2], (3, 3, planes, planes), jnp.float32) * 0.1,
        bn2=_bn_params(ks[3], planes),
        # conv3: PyTorch (planes*4, planes, 1, 1) -> stored (Cin, Cout)
        w3=jax.random.normal(ks[4], (planes, planes * expansion), jnp.float32) * 0.1,
        bn3=_bn_params(ks[5], planes * expansion),
    )


# ----------------------------------------------------------------------------
# Forward (matches Bottleneck.forward: no residual add, no final ReLU).
# ----------------------------------------------------------------------------
def bottleneck_forward(x_nchw, params, *, stride=1, dilation=1,
                       compute_dtype=jnp.bfloat16, row_tile=None):
    out_dtype = x_nchw.dtype
    x = jnp.transpose(x_nchw, (0, 2, 3, 1))              # NCHW -> NHWC
    if stride > 1:
        # conv1 is 1x1 with stride: exactly spatial subsampling then matmul.
        x = x[:, ::stride, ::stride, :]
    N, H, W, Cin = x.shape

    s1, b1 = _bn_fold(*params["bn1"])
    s2, b2 = _bn_fold(*params["bn2"])
    s3, b3 = _bn_fold(*params["bn3"])

    # Fold frozen-BN scales into the conv weights; cast MXU operands to
    # compute_dtype (bf16 by default), keep f32 accumulation + f32 epilogues.
    w1f = (params["w1"] * s1[None, :]).astype(compute_dtype)
    w2f = (params["w2"] * s2[None, None, None, :]).astype(compute_dtype)
    w3f = (params["w3"] * s3[None, :]).astype(compute_dtype)
    planes = w1f.shape[1]

    # Stage 1: conv1 + bn1 + ReLU as an M-tiled channel matmul.
    x2d = x.astype(compute_dtype).reshape(N * H * W, Cin)
    y = conv1x1_bn(x2d, w1f, b1[None, :], relu=True, out_dtype=compute_dtype)
    y = y.reshape(N, H, W, planes)

    # Stage 2: conv2 (3x3 dilated) + bn2 + ReLU fused with conv3 (1x1) + bn3.
    z = conv3x3_conv1x1_bn(y, w2f, b2[None, :], w3f, b3[None, :],
                           dilation=dilation, out_dtype=out_dtype,
                           row_tile=row_tile)
    return jnp.transpose(z, (0, 3, 1, 2))                 # NHWC -> NCHW


# ----------------------------------------------------------------------------
# Pure-JAX reference (eval-mode BN), for correctness checking only.
# ----------------------------------------------------------------------------
def bottleneck_reference(x_nchw, params, *, stride=1, dilation=1):
    def bn(x, gamma, beta, mean, var):
        s = gamma / jnp.sqrt(var + EPS)
        b = beta - mean * s
        return x * s[None, :, None, None] + b[None, :, None, None]

    def conv(x, w_oihw, strd, dil, pad):
        return jax.lax.conv_general_dilated(
            x, w_oihw, window_strides=(strd, strd),
            padding=((pad, pad), (pad, pad)), rhs_dilation=(dil, dil),
            dimension_numbers=("NCHW", "OIHW", "NCHW"))

    w1 = jnp.transpose(params["w1"], (1, 0))[:, :, None, None]
    w2 = jnp.transpose(params["w2"], (3, 2, 0, 1))
    w3 = jnp.transpose(params["w3"], (1, 0))[:, :, None, None]

    y = jax.nn.relu(bn(conv(x_nchw, w1, stride, 1, 0), *params["bn1"]))
    y = jax.nn.relu(bn(conv(y, w2, 1, dilation, dilation), *params["bn2"]))
    return bn(conv(y, w3, 1, 1, 0), *params["bn3"])


if __name__ == "__main__":
    key = jax.random.PRNGKey(0)
    k_x, k_p = jax.random.split(key)

    inplanes, planes = 4, 4
    x = jax.random.normal(k_x, (2, inplanes, 16, 16), jnp.float32)   # NCHW
    params = init_bottleneck_params(k_p, inplanes, planes)

    # Primary run with the perf-default bf16 MXU operands.
    out = jax.block_until_ready(
        bottleneck_forward(x, params, stride=1, dilation=1))
    assert out.shape == (2, planes * 4, 16, 16), out.shape

    # Numerical checks against the pure-JAX reference (f32 compute path),
    # covering dilation (halo taps), forced row tiling, and stride.
    for (st, dil, rt) in [(1, 1, None), (1, 2, 8), (2, 1, None)]:
        got = jax.block_until_ready(
            bottleneck_forward(x, params, stride=st, dilation=dil,
                               compute_dtype=jnp.float32, row_tile=rt))
        want = bottleneck_reference(x, params, stride=st, dilation=dil)
        np.testing.assert_allclose(np.asarray(got), np.asarray(want),
                                   rtol=2e-2, atol=2e-2)

    print("KERNEL_OK")
</pallas_src>

<mosaic_0001>
module attributes {stable_mosaic.version = 11 : i64} {
  func.func @_conv1x1_bias_kernel(%arg0: i32, %arg1: memref<512x4xbf16, #tpu.memory_space<vmem>>, %arg2: memref<4x4xbf16, #tpu.memory_space<vmem>>, %arg3: memref<1x4xf32, #tpu.memory_space<vmem>>, %arg4: memref<512x4xbf16, #tpu.memory_space<vmem>>) attributes {dimension_semantics = [#tpu.dimension_semantics<parallel>], iteration_bounds = array<i64: 1>, scalar_prefetch = 0 : i64, scratch_operands = 0 : i64, tpu.core_type = #tpu.core_type<tc>, window_params = [{transform_indices = @transform_0, window_bounds = array<i64: 512, 4>}, {pipeline_mode = #tpu.pipeline_mode<synchronous>, transform_indices = @transform_1, window_bounds = array<i64: 4, 4>}, {pipeline_mode = #tpu.pipeline_mode<synchronous>, transform_indices = @transform_2, window_bounds = array<i64: 1, 4>}, {transform_indices = @transform_3, window_bounds = array<i64: 512, 4>}]} {
    %c0 = arith.constant 0 : index
    %c0_0 = arith.constant 0 : index
    %0 = vector.load %arg1[%c0, %c0_0] : memref<512x4xbf16, #tpu.memory_space<vmem>>, vector<512x4xbf16>
    %c0_1 = arith.constant 0 : index
    %c0_2 = arith.constant 0 : index
    %1 = vector.load %arg2[%c0_1, %c0_2] : memref<4x4xbf16, #tpu.memory_space<vmem>>, vector<4x4xbf16>
    %cst = arith.constant dense<0.000000e+00> : vector<512x4xf32>
    %2 = tpu.matmul %0, %1, %cst {dimension_numbers = #tpu.dot_dimension_numbers<[1], [0], [0], [1], [0, 0, 1, 1], [], []>} : vector<512x4xbf16>, vector<4x4xbf16>, vector<512x4xf32> -> vector<512x4xf32>
    %c0_3 = arith.constant 0 : index
    %c0_4 = arith.constant 0 : index
    %3 = vector.load %arg3[%c0_3, %c0_4] : memref<1x4xf32, #tpu.memory_space<vmem>>, vector<1x4xf32>
    %4 = vector.broadcast %3 : vector<1x4xf32> to vector<512x4xf32>
    %5 = arith.addf %2, %4 : vector<512x4xf32>
    %cst_5 = arith.constant 0.000000e+00 : f32
    %6 = vector.broadcast %cst_5 : f32 to vector<512x4xf32>
    %7 = arith.maximumf %5, %6 : vector<512x4xf32>
    %8 = arith.truncf %7 : vector<512x4xf32> to vector<512x4xbf16>
    %c0_6 = arith.constant 0 : index
    %c0_7 = arith.constant 0 : index
    %9 = vector.load %arg4[%c0_6, %c0_7] : memref<512x4xbf16, #tpu.memory_space<vmem>>, vector<512x4xbf16>
    tpu.vector_store %arg4[%c0_6, %c0_7], %8 {strides = array<i32>} : memref<512x4xbf16, #tpu.memory_space<vmem>>, vector<512x4xbf16>,
    return
  }
  func.func @transform_0(%arg0: i32) -> (i32, i32) {
    %c0_i32 = arith.constant 0 : i32
    %c0_i32_0 = arith.constant 0 : i32
    return %arg0, %c0_i32 : i32, i32
  }
  func.func @transform_1(%arg0: i32) -> (i32, i32) {
    %c0_i32 = arith.constant 0 : i32
    %c0_i32_0 = arith.constant 0 : i32
    %c0_i32_1 = arith.constant 0 : i32
    return %c0_i32, %c0_i32_0 : i32, i32
  }
  func.func @transform_2(%arg0: i32) -> (i32, i32) {
    %c0_i32 = arith.constant 0 : i32
    %c0_i32_0 = arith.constant 0 : i32
    %c0_i32_1 = arith.constant 0 : i32
    return %c0_i32, %c0_i32_0 : i32, i32
  }
  func.func @transform_3(%arg0: i32) -> (i32, i32) {
    %c0_i32 = arith.constant 0 : i32
    %c0_i32_0 = arith.constant 0 : i32
    return %arg0, %c0_i32 : i32, i32
  }
}

</mosaic_0001>

<llo_original>
// kernel: tpu_custom_call.1
$region0: #{tpu_custom_call.1}
  #allocation0 [shape = 'u32[]', space=smem, size = 0x4, offset = 0x4, fixed_abs, tag = 'smem constant byte address 0x4 - core index']
  #allocation1 [shape = 'u32[72,128]{1,0:T(1,128)}', space=vmem, size = 0x9000, scoped, tag = 'internal scratch']
  %s0 = inlined_call_operand.vmem [shape: bf16[512,4], index: 0, kind: input, shape index: {}]
  %s1 = inlined_call_operand.vmem [shape: bf16[4,4], index: 1, kind: input, shape index: {}]
  %s2 = inlined_call_operand.vmem [shape: f32[1,4], index: 2, kind: input, shape index: {}]
  %s3 = inlined_call_operand.vmem [shape: bf16[512,4], index: 3, kind: output, shape index: {}]
  %s4 = sld [smem:[#allocation0]]
  $region22: #{tpu_custom_call.1} parent=0
    _
  %s6 = ssub.s32 1, %s4
  %s7 = scalar_select 0, %s6, %s4
  // Predicated region
  $region2: #{tpu_custom_call.1} parent=0 // pred_check
    _
  $region3: #{tpu_custom_call.1} parent=0 // pred_check_branch
    %9 = sbr.rel (0) target = $region5
  $region4: #{tpu_custom_call.1} parent=0 // pred_region
    _
  $region5: #{tpu_custom_call.1} parent=0 // pred_fallthru
    _
  // Predicated region
  $region6: #{tpu_custom_call.1} parent=0 // pred_check
    _
  $region7: #{tpu_custom_call.1} parent=0 // pred_check_branch
    %11 = sbr.rel (0) target = $region9
  $region8: #{tpu_custom_call.1} parent=0 // pred_region
    _
  $region9: #{tpu_custom_call.1} parent=0 // pred_fallthru
    _
  // Predicated region
  $region10: #{tpu_custom_call.1} parent=0 // pred_check
    _
  $region11: #{tpu_custom_call.1} parent=0 // pred_check_branch
    %13 = sbr.rel (0) target = $region13
  $region12: #{tpu_custom_call.1} parent=0 // pred_region
    _
  $region13: #{tpu_custom_call.1} parent=0 // pred_fallthru
    _
  %v15 = vld [vmem:[%s0] sm:$0xf]
  %v16 = vld [vmem:[%s0 + $0x4] sm:$0xf]
  %v17 = vld [vmem:[%s0 + $0x8] sm:$0xf]
  %v18 = vld [vmem:[%s0 + $0xc] sm:$0xf]
  %v19 = vld [vmem:[%s0 + $0x10] sm:$0xf]
  %v20 = vld [vmem:[%s0 + $0x14] sm:$0xf]
  %v21 = vld [vmem:[%s0 + $0x18] sm:$0xf]
  %v22 = vld [vmem:[%s0 + $0x1c] sm:$0xf]
  %v23 = vld [vmem:[%s0 + $0x20] sm:$0xf]
  %v24 = vld [vmem:[%s0 + $0x24] sm:$0xf]
  %v25 = vld [vmem:[%s0 + $0x28] sm:$0xf]
  %v26 = vld [vmem:[%s0 + $0x2c] sm:$0xf]
  %v27 = vld [vmem:[%s0 + $0x30] sm:$0xf]
  %v28 = vld [vmem:[%s0 + $0x34] sm:$0xf]
  %v29 = vld [vmem:[%s0 + $0x38] sm:$0xf]
  %v30 = vld [vmem:[%s0 + $0x3c] sm:$0xf]
  %v31 = vld [vmem:[%s0 + $0x40] sm:$0xf]
  %v32 = vld [vmem:[%s0 + $0x44] sm:$0xf]
  %v33 = vld [vmem:[%s0 + $0x48] sm:$0xf]
  %v34 = vld [vmem:[%s0 + $0x4c] sm:$0xf]
  %v35 = vld [vmem:[%s0 + $0x50] sm:$0xf]
  %v36 = vld [vmem:[%s0 + $0x54] sm:$0xf]
  %v37 = vld [vmem:[%s0 + $0x58] sm:$0xf]
  %v38 = vld [vmem:[%s0 + $0x5c] sm:$0xf]
  %v39 = vld [vmem:[%s0 + $0x60] sm:$0xf]
  %v40 = vld [vmem:[%s0 + $0x64] sm:$0xf]
  %v41 = vld [vmem:[%s0 + $0x68] sm:$0xf]
  %v42 = vld [vmem:[%s0 + $0x6c] sm:$0xf]
  %v43 = vld [vmem:[%s0 + $0x70] sm:$0xf]
  %v44 = vld [vmem:[%s0 + $0x74] sm:$0xf]
  %v45 = vld [vmem:[%s0 + $0x78] sm:$0xf]
  %v46 = vld [vmem:[%s0 + $0x7c] sm:$0xf]
  %v47 = vld [vmem:[%s0 + $0x80] sm:$0xf]
  %v48 = vld [vmem:[%s0 + $0x84] sm:$0xf]
  %v49 = vld [vmem:[%s0 + $0x88] sm:$0xf]
  %v50 = vld [vmem:[%s0 + $0x8c] sm:$0xf]
  %v51 = vld [vmem:[%s0 + $0x90] sm:$0xf]
  %v52 = vld [vmem:[%s0 + $0x94] sm:$0xf]
  %v53 = vld [vmem:[%s0 + $0x98] sm:$0xf]
  %v54 = vld [vmem:[%s0 + $0x9c] sm:$0xf]
  %v55 = vld [vmem:[%s0 + $0xa0] sm:$0xf]
  %v56 = vld [vmem:[%s0 + $0xa4] sm:$0xf]
  %v57 = vld [vmem:[%s0 + $0xa8] sm:$0xf]
  %v58 = vld [vmem:[%s0 + $0xac] sm:$0xf]
  %v59 = vld [vmem:[%s0 + $0xb0] sm:$0xf]
  %v60 = vld [vmem:[%s0 + $0xb4] sm:$0xf]
  %v61 = vld [vmem:[%s0 + $0xb8] sm:$0xf]
  %v62 = vld [vmem:[%s0 + $0xbc] sm:$0xf]
  %v63 = vld [vmem:[%s0 + $0xc0] sm:$0xf]
  %v64 = vld [vmem:[%s0 + $0xc4] sm:$0xf]
  %v65 = vld [vmem:[%s0 + $0xc8] sm:$0xf]
  %v66 = vld [vmem:[%s0 + $0xcc] sm:$0xf]
  %v67 = vld [vmem:[%s0 + $0xd0] sm:$0xf]
  %v68 = vld [vmem:[%s0 + $0xd4] sm:$0xf]
  %v69 = vld [vmem:[%s0 + $0xd8] sm:$0xf]
  %v70 = vld [vmem:[%s0 + $0xdc] sm:$0xf]
  %v71 = vld [vmem:[%s0 + $0xe0] sm:$0xf]
  %v72 = vld [vmem:[%s0 + $0xe4] sm:$0xf]
  %v73 = vld [vmem:[%s0 + $0xe8] sm:$0xf]
  %v74 = vld [vmem:[%s0 + $0xec] sm:$0xf]
  %v75 = vld [vmem:[%s0 + $0xf0] sm:$0xf]
  %v76 = vld [vmem:[%s0 + $0xf4] sm:$0xf]
  %v77 = vld [vmem:[%s0 + $0xf8] sm:$0xf]
  %v78 = vld [vmem:[%s0 + $0xfc] sm:$0xf]
  %v79 = vld [vmem:[%s1] sm:$0x3]
  %v80 = vld [vmem:[%s2] sm:$0x1]
  %v82 = vperm.slane %v80, 0
  %v148 = vunpack.c.l.b16 %v15
  %v149 = vunpack.c.l.b16 %v16
  %v150 = vunpack.c.l.b16 %v17
  %v151 = vunpack.c.l.b16 %v18
  %v152 = vunpack.c.l.b16 %v19
  %v153 = vunpack.c.l.b16 %v20
  %v154 = vunpack.c.l.b16 %v21
  %v155 = vunpack.c.l.b16 %v22
  %v156 = vunpack.c.l.b16 %v23
  %v157 = vunpack.c.l.b16 %v24
  %v158 = vunpack.c.l.b16 %v25
  %v159 = vunpack.c.l.b16 %v26
  %v160 = vunpack.c.l.b16 %v27
  %v161 = vunpack.c.l.b16 %v28
  %v162 = vunpack.c.l.b16 %v29
  %v163 = vunpack.c.l.b16 %v30
  %v164 = vunpack.c.l.b16 %v31
  %v165 = vunpack.c.l.b16 %v32
  %v166 = vunpack.c.l.b16 %v33
  %v167 = vunpack.c.l.b16 %v34
  %v168 = vunpack.c.l.b16 %v35
  %v169 = vunpack.c.l.b16 %v36
  %v170 = vunpack.c.l.b16 %v37
  %v171 = vunpack.c.l.b16 %v38
  %v172 = vunpack.c.l.b16 %v39
  %v173 = vunpack.c.l.b16 %v40
  %v174 = vunpack.c.l.b16 %v41
  %v175 = vunpack.c.l.b16 %v42
  %v176 = vunpack.c.l.b16 %v43
  %v177 = vunpack.c.l.b16 %v44
  %v178 = vunpack.c.l.b16 %v45
  %v179 = vunpack.c.l.b16 %v46
  %v180 = vunpack.c.l.b16 %v47
  %v181 = vunpack.c.l.b16 %v48
  %v182 = vunpack.c.l.b16 %v49
  %v183 = vunpack.c.l.b16 %v50
  %v184 = vunpack.c.l.b16 %v51
  %v185 = vunpack.c.l.b16 %v52
  %v186 = vunpack.c.l.b16 %v53
  %v187 = vunpack.c.l.b16 %v54
  %v188 = vunpack.c.l.b16 %v55
  %v189 = vunpack.c.l.b16 %v56
  %v190 = vunpack.c.l.b16 %v57
  %v191 = vunpack.c.l.b16 %v58
  %v192 = vunpack.c.l.b16 %v59
  %v193 = vunpack.c.l.b16 %v60
  %v194 = vunpack.c.l.b16 %v61
  %v195 = vunpack.c.l.b16 %v62
  %v196 = vunpack.c.l.b16 %v63
  %v197 = vunpack.c.l.b16 %v64
  %v198 = vunpack.c.l.b16 %v65
  %v199 = vunpack.c.l.b16 %v66
  %v200 = vunpack.c.l.b16 %v67
  %v201 = vunpack.c.l.b16 %v68
  %v202 = vunpack.c.l.b16 %v69
  %v203 = vunpack.c.l.b16 %v70
  %v204 = vunpack.c.l.b16 %v71
  %v205 = vunpack.c.l.b16 %v72
  %v206 = vunpack.c.l.b16 %v73
  %v207 = vunpack.c.l.b16 %v74
  %v208 = vunpack.c.l.b16 %v75
  %v209 = vunpack.c.l.b16 %v76
  %v210 = vunpack.c.l.b16 %v77
  %v211 = vunpack.c.l.b16 %v78
  %v212 = vpack.c.b16 %v149, %v148
  %v213 = vpack.c.b16 %v151, %v150
  %v214 = vpack.c.b16 %v153, %v152
  %v215 = vpack.c.b16 %v155, %v154
  %v216 = vpack.c.b16 %v157, %v156
  %v217 = vpack.c.b16 %v159, %v158
  %v218 = vpack.c.b16 %v161, %v160
  %v219 = vpack.c.b16 %v163, %v162
  %v220 = vpack.c.b16 %v165, %v164
  %v221 = vpack.c.b16 %v167, %v166
  %v222 = vpack.c.b16 %v169, %v168
  %v223 = vpack.c.b16 %v171, %v170
  %v224 = vpack.c.b16 %v173, %v172
  %v225 = vpack.c.b16 %v175, %v174
  %v226 = vpack.c.b16 %v177, %v176
  %v227 = vpack.c.b16 %v179, %v178
  %v228 = vpack.c.b16 %v181, %v180
  %v229 = vpack.c.b16 %v183, %v182
  %v230 = vpack.c.b16 %v185, %v184
  %v231 = vpack.c.b16 %v187, %v186
  %v232 = vpack.c.b16 %v189, %v188
  %v233 = vpack.c.b16 %v191, %v190
  %v234 = vpack.c.b16 %v193, %v192
  %v235 = vpack.c.b16 %v195, %v194
  %v236 = vpack.c.b16 %v197, %v196
  %v237 = vpack.c.b16 %v199, %v198
  %v238 = vpack.c.b16 %v201, %v200
  %v239 = vpack.c.b16 %v203, %v202
  %v240 = vpack.c.b16 %v205, %v204
  %v241 = vpack.c.b16 %v207, %v206
  %v242 = vpack.c.b16 %v209, %v208
  %v243 = vpack.c.b16 %v211, %v210
  %vm244 = vcmask 31744
  %v246 = vsel %vm244, %v212, 0
  %v249 = vsel %vm244, %v213, 0
  %v252 = vsel %vm244, %v214, 0
  %v255 = vsel %vm244, %v215, 0
  %v258 = vsel %vm244, %v216, 0
  %v261 = vsel %vm244, %v217, 0
  %v264 = vsel %vm244, %v218, 0
  %v267 = vsel %vm244, %v219, 0
  %v270 = vsel %vm244, %v220, 0
  %v273 = vsel %vm244, %v221, 0
  %v276 = vsel %vm244, %v222, 0
  %v279 = vsel %vm244, %v223, 0
  %v282 = vsel %vm244, %v224, 0
  %v285 = vsel %vm244, %v225, 0
  %v288 = vsel %vm244, %v226, 0
  %v291 = vsel %vm244, %v227, 0
  %v294 = vsel %vm244, %v228, 0
  %v297 = vsel %vm244, %v229, 0
  %v300 = vsel %vm244, %v230, 0
  %v303 = vsel %vm244, %v231, 0
  %v306 = vsel %vm244, %v232, 0
  %v309 = vsel %vm244, %v233, 0
  %v312 = vsel %vm244, %v234, 0
  %v315 = vsel %vm244, %v235, 0
  %v318 = vsel %vm244, %v236, 0
  %v321 = vsel %vm244, %v237, 0
  %v324 = vsel %vm244, %v238, 0
  %v327 = vsel %vm244, %v239, 0
  %v330 = vsel %vm244, %v240, 0
  %v333 = vsel %vm244, %v241, 0
  %v336 = vsel %vm244, %v242, 0
  %v339 = vsel %vm244, %v243, 0
  %vm341 = vcmask 1041408
  %v343 = vsel %vm341, %v79, 0
  %345 = vmatpush.bf16.msra.mxu0 0
  %346 = vmatpush.bf16.msra.mxu0 0
  %347 = vmatpush.bf16.msra.mxu0 0
  %348 = vmatpush.bf16.msra.mxu0 0
  %349 = vmatpush.bf16.msra.mxu0 0
  %350 = vmatpush.bf16.msra.mxu0 0
  %351 = vmatpush.bf16.msra.mxu0 0
  %352 = vmatpush.bf16.msra.mxu0 %v343
  %353 = vmatmul.bf16.gmra.mxu0 %v246
  %v354 = vpop.f32.mrf.mxu0
  %v355 = vadd.f32 %v82, %v354
  %v356 = vpop.f32.mrf.mxu0
  %v357 = vadd.f32 %v82, %v356
  %358 = vmatmul.bf16.gmra.mxu0 %v249
  %v359 = vpop.f32.mrf.mxu0
  %v360 = vadd.f32 %v82, %v359
  %v361 = vpop.f32.mrf.mxu0
  %v362 = vadd.f32 %v82, %v361
  %363 = vmatmul.bf16.gmra.mxu0 %v252
  %v364 = vpop.f32.mrf.mxu0
  %v365 = vadd.f32 %v82, %v364
  %v366 = vpop.f32.mrf.mxu0
  %v367 = vadd.f32 %v82, %v366
  %368 = vmatmul.bf16.gmra.mxu0 %v255
  %v369 = vpop.f32.mrf.mxu0
  %v370 = vadd.f32 %v82, %v369
  %v371 = vpop.f32.mrf.mxu0
  %v372 = vadd.f32 %v82, %v371
  %373 = vmatmul.bf16.gmra.mxu0 %v258
  %v374 = vpop.f32.mrf.mxu0
  %v375 = vadd.f32 %v82, %v374
  %v376 = vpop.f32.mrf.mxu0
  %v377 = vadd.f32 %v82, %v376
  %378 = vmatmul.bf16.gmra.mxu0 %v261
  %v379 = vpop.f32.mrf.mxu0
  %v380 = vadd.f32 %v82, %v379
  %v381 = vpop.f32.mrf.mxu0
  %v382 = vadd.f32 %v82, %v381
  %383 = vmatmul.bf16.gmra.mxu0 %v264
  %v384 = vpop.f32.mrf.mxu0
  %v385 = vadd.f32 %v82, %v384
  %v386 = vpop.f32.mrf.mxu0
  %v387 = vadd.f32 %v82, %v386
  %388 = vmatmul.bf16.gmra.mxu0 %v267
  %v389 = vpop.f32.mrf.mxu0
  %v390 = vadd.f32 %v82, %v389
  %v391 = vpop.f32.mrf.mxu0
  %v392 = vadd.f32 %v82, %v391
  %393 = vmatmul.bf16.gmra.mxu0 %v270
  %v394 = vpop.f32.mrf.mxu0
  %v395 = vadd.f32 %v82, %v394
  %v396 = vpop.f32.mrf.mxu0
  %v397 = vadd.f32 %v82, %v396
  %398 = vmatmul.bf16.gmra.mxu0 %v273
  %v399 = vpop.f32.mrf.mxu0
  %v400 = vadd.f32 %v82, %v399
  %v401 = vpop.f32.mrf.mxu0
  %v402 = vadd.f32 %v82, %v401
  %403 = vmatmul.bf16.gmra.mxu0 %v276
  %v404 = vpop.f32.mrf.mxu0
  %v405 = vadd.f32 %v82, %v404
  %v406 = vpop.f32.mrf.mxu0
  %v407 = vadd.f32 %v82, %v406
  %408 = vmatmul.bf16.gmra.mxu0 %v279
  %v409 = vpop.f32.mrf.mxu0
  %v410 = vadd.f32 %v82, %v409
  %v411 = vpop.f32.mrf.mxu0
  %v412 = vadd.f32 %v82, %v411
  %413 = vmatmul.bf16.gmra.mxu0 %v282
  %v414 = vpop.f32.mrf.mxu0
  %v415 = vadd.f32 %v82, %v414
  %v416 = vpop.f32.mrf.mxu0
  %v417 = vadd.f32 %v82, %v416
  %418 = vmatmul.bf16.gmra.mxu0 %v285
  %v419 = vpop.f32.mrf.mxu0
  %v420 = vadd.f32 %v82, %v419
  %v421 = vpop.f32.mrf.mxu0
  %v422 = vadd.f32 %v82, %v421
  %423 = vmatmul.bf16.gmra.mxu0 %v288
  %v424 = vpop.f32.mrf.mxu0
  %v425 = vadd.f32 %v82, %v424
  %v426 = vpop.f32.mrf.mxu0
  %v427 = vadd.f32 %v82, %v426
  %428 = vmatmul.bf16.gmra.mxu0 %v291
  %v429 = vpop.f32.mrf.mxu0
  %v430 = vadd.f32 %v82, %v429
  %v431 = vpop.f32.mrf.mxu0
  %v432 = vadd.f32 %v82, %v431
  %433 = vmatmul.bf16.gmra.mxu0 %v294
  %v434 = vpop.f32.mrf.mxu0
  %v435 = vadd.f32 %v82, %v434
  %v436 = vpop.f32.mrf.mxu0
  %v437 = vadd.f32 %v82, %v436
  %438 = vmatmul.bf16.gmra.mxu0 %v297
  %v439 = vpop.f32.mrf.mxu0
  %v440 = vadd.f32 %v82, %v439
  %v441 = vpop.f32.mrf.mxu0
  %v442 = vadd.f32 %v82, %v441
  %443 = vmatmul.bf16.gmra.mxu0 %v300
  %v444 = vpop.f32.mrf.mxu0
  %v445 = vadd.f32 %v82, %v444
  %v446 = vpop.f32.mrf.mxu0
  %v447 = vadd.f32 %v82, %v446
  %448 = vmatmul.bf16.gmra.mxu0 %v303
  %v449 = vpop.f32.mrf.mxu0
  %v450 = vadd.f32 %v82, %v449
  %v451 = vpop.f32.mrf.mxu0
  %v452 = vadd.f32 %v82, %v451
  %453 = vmatmul.bf16.gmra.mxu0 %v306
  %v454 = vpop.f32.mrf.mxu0
  %v455 = vadd.f32 %v82, %v454
  %v456 = vpop.f32.mrf.mxu0
  %v457 = vadd.f32 %v82, %v456
  %458 = vmatmul.bf16.gmra.mxu0 %v309
  %v459 = vpop.f32.mrf.mxu0
  %v460 = vadd.f32 %v82, %v459
  %v461 = vpop.f32.mrf.mxu0
  %v462 = vadd.f32 %v82, %v461
  %463 = vmatmul.bf16.gmra.mxu0 %v312
  %v464 = vpop.f32.mrf.mxu0
  %v465 = vadd.f32 %v82, %v464
  %v466 = vpop.f32.mrf.mxu0
  %v467 = vadd.f32 %v82, %v466
  %468 = vmatmul.bf16.gmra.mxu0 %v315
  %v469 = vpop.f32.mrf.mxu0
  %v470 = vadd.f32 %v82, %v469
  %v471 = vpop.f32.mrf.mxu0
  %v472 = vadd.f32 %v82, %v471
  %473 = vmatmul.bf16.gmra.mxu0 %v318
  %v474 = vpop.f32.mrf.mxu0
  %v475 = vadd.f32 %v82, %v474
  %v476 = vpop.f32.mrf.mxu0
  %v477 = vadd.f32 %v82, %v476
  %478 = vmatmul.bf16.gmra.mxu0 %v321
  %v479 = vpop.f32.mrf.mxu0
  %v480 = vadd.f32 %v82, %v479
  %v481 = vpop.f32.mrf.mxu0
  %v482 = vadd.f32 %v82, %v481
  %483 = vmatmul.bf16.gmra.mxu0 %v324
  %v484 = vpop.f32.mrf.mxu0
  %v485 = vadd.f32 %v82, %v484
  %v486 = vpop.f32.mrf.mxu0
  %v487 = vadd.f32 %v82, %v486
  %488 = vmatmul.bf16.gmra.mxu0 %v327
  %v489 = vpop.f32.mrf.mxu0
  %v490 = vadd.f32 %v82, %v489
  %v491 = vpop.f32.mrf.mxu0
  %v492 = vadd.f32 %v82, %v491
  %493 = vmatmul.bf16.gmra.mxu0 %v330
  %v494 = vpop.f32.mrf.mxu0
  %v495 = vadd.f32 %v82, %v494
  %v496 = vpop.f32.mrf.mxu0
  %v497 = vadd.f32 %v82, %v496
  %498 = vmatmul.bf16.gmra.mxu0 %v333
  %v499 = vpop.f32.mrf.mxu0
  %v500 = vadd.f32 %v82, %v499
  %v501 = vpop.f32.mrf.mxu0
  %v502 = vadd.f32 %v82, %v501
  %503 = vmatmul.bf16.gmra.mxu0 %v336
  %v504 = vpop.f32.mrf.mxu0
  %v505 = vadd.f32 %v82, %v504
  %v506 = vpop.f32.mrf.mxu0
  %v507 = vadd.f32 %v82, %v506
  %508 = vmatmul.bf16.gmra.mxu0 %v339
  %v509 = vpop.f32.mrf.mxu0
  %v510 = vadd.f32 %v82, %v509
  %v511 = vpop.f32.mrf.mxu0
  %v512 = vadd.f32 %v82, %v511
  %513 = vdwg.mxu0
  %v514 = vmax.f32 %v355, 0.0
  %v515 = vmax.f32 %v357, 0.0
  %v516 = vmax.f32 %v360, 0.0
  %v517 = vmax.f32 %v362, 0.0
  %v518 = vmax.f32 %v365, 0.0
  %v519 = vmax.f32 %v367, 0.0
  %v520 = vmax.f32 %v370, 0.0
  %v521 = vmax.f32 %v372, 0.0
  %v522 = vmax.f32 %v375, 0.0
  %v523 = vmax.f32 %v377, 0.0
  %v524 = vmax.f32 %v380, 0.0
  %v525 = vmax.f32 %v382, 0.0
  %v526 = vmax.f32 %v385, 0.0
  %v527 = vmax.f32 %v387, 0.0
  %v528 = vmax.f32 %v390, 0.0
  %v529 = vmax.f32 %v392, 0.0
  %v530 = vmax.f32 %v395, 0.0
  %v531 = vmax.f32 %v397, 0.0
  %v532 = vmax.f32 %v400, 0.0
  %v533 = vmax.f32 %v402, 0.0
  %v534 = vmax.f32 %v405, 0.0
  %v535 = vmax.f32 %v407, 0.0
  %v536 = vmax.f32 %v410, 0.0
  %v537 = vmax.f32 %v412, 0.0
  %v538 = vmax.f32 %v415, 0.0
  %v539 = vmax.f32 %v417, 0.0
  %v540 = vmax.f32 %v420, 0.0
  %v541 = vmax.f32 %v422, 0.0
  %v542 = vmax.f32 %v425, 0.0
  %v543 = vmax.f32 %v427, 0.0
  %v544 = vmax.f32 %v430, 0.0
  %v545 = vmax.f32 %v432, 0.0
  %v546 = vmax.f32 %v435, 0.0
  %v547 = vmax.f32 %v437, 0.0
  %v548 = vmax.f32 %v440, 0.0
  %v549 = vmax.f32 %v442, 0.0
  %v550 = vmax.f32 %v445, 0.0
  %v551 = vmax.f32 %v447, 0.0
  %v552 = vmax.f32 %v450, 0.0
  %v553 = vmax.f32 %v452, 0.0
  %v554 = vmax.f32 %v455, 0.0
  %v555 = vmax.f32 %v457, 0.0
  %v556 = vmax.f32 %v460, 0.0
  %v557 = vmax.f32 %v462, 0.0
  %v558 = vmax.f32 %v465, 0.0
  %v559 = vmax.f32 %v467, 0.0
  %v560 = vmax.f32 %v470, 0.0
  %v561 = vmax.f32 %v472, 0.0
  %v562 = vmax.f32 %v475, 0.0
  %v563 = vmax.f32 %v477, 0.0
  %v564 = vmax.f32 %v480, 0.0
  %v565 = vmax.f32 %v482, 0.0
  %v566 = vmax.f32 %v485, 0.0
  %v567 = vmax.f32 %v487, 0.0
  %v568 = vmax.f32 %v490, 0.0
  %v569 = vmax.f32 %v492, 0.0
  %v570 = vmax.f32 %v495, 0.0
  %v571 = vmax.f32 %v497, 0.0
  %v572 = vmax.f32 %v500, 0.0
  %v573 = vmax.f32 %v502, 0.0
  %v574 = vmax.f32 %v505, 0.0
  %v575 = vmax.f32 %v507, 0.0
  %v576 = vmax.f32 %v510, 0.0
  %v577 = vmax.f32 %v512, 0.0
  %v578 = vpack.c.bf16 %v514, %v514
  %v579 = vpack.c.bf16 %v515, %v515
  %v580 = vpack.c.bf16 %v516, %v516
  %v581 = vpack.c.bf16 %v517, %v517
  %v582 = vpack.c.bf16 %v518, %v518
  %v583 = vpack.c.bf16 %v519, %v519
  %v584 = vpack.c.bf16 %v520, %v520
  %v585 = vpack.c.bf16 %v521, %v521
  %v586 = vpack.c.bf16 %v522, %v522
  %v587 = vpack.c.bf16 %v523, %v523
  %v588 = vpack.c.bf16 %v524, %v524
  %v589 = vpack.c.bf16 %v525, %v525
  %v590 = vpack.c.bf16 %v526, %v526
  %v591 = vpack.c.bf16 %v527, %v527
  %v592 = vpack.c.bf16 %v528, %v528
  %v593 = vpack.c.bf16 %v529, %v529
  %v594 = vpack.c.bf16 %v530, %v530
  %v595 = vpack.c.bf16 %v531, %v531
  %v596 = vpack.c.bf16 %v532, %v532
  %v597 = vpack.c.bf16 %v533, %v533
  %v598 = vpack.c.bf16 %v534, %v534
  %v599 = vpack.c.bf16 %v535, %v535
  %v600 = vpack.c.bf16 %v536, %v536
  %v601 = vpack.c.bf16 %v537, %v537
  %v602 = vpack.c.bf16 %v538, %v538
  %v603 = vpack.c.bf16 %v539, %v539
  %v604 = vpack.c.bf16 %v540, %v540
  %v605 = vpack.c.bf16 %v541, %v541
  %v606 = vpack.c.bf16 %v542, %v542
  %v607 = vpack.c.bf16 %v543, %v543
  %v608 = vpack.c.bf16 %v544, %v544
  %v609 = vpack.c.bf16 %v545, %v545
  %v610 = vpack.c.bf16 %v546, %v546
  %v611 = vpack.c.bf16 %v547, %v547
  %v612 = vpack.c.bf16 %v548, %v548
  %v613 = vpack.c.bf16 %v549, %v549
  %v614 = vpack.c.bf16 %v550, %v550
  %v615 = vpack.c.bf16 %v551, %v551
  %v616 = vpack.c.bf16 %v552, %v552
  %v617 = vpack.c.bf16 %v553, %v553
  %v618 = vpack.c.bf16 %v554, %v554
  %v619 = vpack.c.bf16 %v555, %v555
  %v620 = vpack.c.bf16 %v556, %v556
  %v621 = vpack.c.bf16 %v557, %v557
  %v622 = vpack.c.bf16 %v558, %v558
  %v623 = vpack.c.bf16 %v559, %v559
  %v624 = vpack.c.bf16 %v560, %v560
  %v625 = vpack.c.bf16 %v561, %v561
  %v626 = vpack.c.bf16 %v562, %v562
  %v627 = vpack.c.bf16 %v563, %v563
  %v628 = vpack.c.bf16 %v564, %v564
  %v629 = vpack.c.bf16 %v565, %v565
  %v630 = vpack.c.bf16 %v566, %v566
  %v631 = vpack.c.bf16 %v567, %v567
  %v632 = vpack.c.bf16 %v568, %v568
  %v633 = vpack.c.bf16 %v569, %v569
  %v634 = vpack.c.bf16 %v570, %v570
  %v635 = vpack.c.bf16 %v571, %v571
  %v636 = vpack.c.bf16 %v572, %v572
  %v637 = vpack.c.bf16 %v573, %v573
  %v638 = vpack.c.bf16 %v574, %v574
  %v639 = vpack.c.bf16 %v575, %v575
  %v640 = vpack.c.bf16 %v576, %v576
  %v641 = vpack.c.bf16 %v577, %v577
  %vm642 = vcmask 27648
  %643 = vst.msk [vmem:[%s3] sm:$0xf] %vm642, %v578
  %644 = vst.msk [vmem:[%s3 + $0x4] sm:$0xf] %vm642, %v579
  %645 = vst.msk [vmem:[%s3 + $0x8] sm:$0xf] %vm642, %v580
  %646 = vst.msk [vmem:[%s3 + $0xc] sm:$0xf] %vm642, %v581
  %647 = vst.msk [vmem:[%s3 + $0x10] sm:$0xf] %vm642, %v582
  %648 = vst.msk [vmem:[%s3 + $0x14] sm:$0xf] %vm642, %v583
  %649 = vst.msk [vmem:[%s3 + $0x18] sm:$0xf] %vm642, %v584
  %650 = vst.msk [vmem:[%s3 + $0x1c] sm:$0xf] %vm642, %v585
  %651 = vst.msk [vmem:[%s3 + $0x20] sm:$0xf] %vm642, %v586
  %652 = vst.msk [vmem:[%s3 + $0x24] sm:$0xf] %vm642, %v587
  %653 = vst.msk [vmem:[%s3 + $0x28] sm:$0xf] %vm642, %v588
  %654 = vst.msk [vmem:[%s3 + $0x2c] sm:$0xf] %vm642, %v589
  %655 = vst.msk [vmem:[%s3 + $0x30] sm:$0xf] %vm642, %v590
  %656 = vst.msk [vmem:[%s3 + $0x34] sm:$0xf] %vm642, %v591
  %657 = vst.msk [vmem:[%s3 + $0x38] sm:$0xf] %vm642, %v592
  %658 = vst.msk [vmem:[%s3 + $0x3c] sm:$0xf] %vm642, %v593
  %659 = vst.msk [vmem:[%s3 + $0x40] sm:$0xf] %vm642, %v594
  %660 = vst.msk [vmem:[%s3 + $0x44] sm:$0xf] %vm642, %v595
  %661 = vst.msk [vmem:[%s3 + $0x48] sm:$0xf] %vm642, %v596
  %662 = vst.msk [vmem:[%s3 + $0x4c] sm:$0xf] %vm642, %v597
  %663 = vst.msk [vmem:[%s3 + $0x50] sm:$0xf] %vm642, %v598
  %664 = vst.msk [vmem:[%s3 + $0x54] sm:$0xf] %vm642, %v599
  %665 = vst.msk [vmem:[%s3 + $0x58] sm:$0xf] %vm642, %v600
  %666 = vst.msk [vmem:[%s3 + $0x5c] sm:$0xf] %vm642, %v601
  %667 = vst.msk [vmem:[%s3 + $0x60] sm:$0xf] %vm642, %v602
  %668 = vst.msk [vmem:[%s3 + $0x64] sm:$0xf] %vm642, %v603
  %669 = vst.msk [vmem:[%s3 + $0x68] sm:$0xf] %vm642, %v604
  %670 = vst.msk [vmem:[%s3 + $0x6c] sm:$0xf] %vm642, %v605
  %671 = vst.msk [vmem:[%s3 + $0x70] sm:$0xf] %vm642, %v606
  %672 = vst.msk [vmem:[%s3 + $0x74] sm:$0xf] %vm642, %v607
  %673 = vst.msk [vmem:[%s3 + $0x78] sm:$0xf] %vm642, %v608
  %674 = vst.msk [vmem:[%s3 + $0x7c] sm:$0xf] %vm642, %v609
  %675 = vst.msk [vmem:[%s3 + $0x80] sm:$0xf] %vm642, %v610
  %676 = vst.msk [vmem:[%s3 + $0x84] sm:$0xf] %vm642, %v611
  %677 = vst.msk [vmem:[%s3 + $0x88] sm:$0xf] %vm642, %v612
  %678 = vst.msk [vmem:[%s3 + $0x8c] sm:$0xf] %vm642, %v613
  %679 = vst.msk [vmem:[%s3 + $0x90] sm:$0xf] %vm642, %v614
  %680 = vst.msk [vmem:[%s3 + $0x94] sm:$0xf] %vm642, %v615
  %681 = vst.msk [vmem:[%s3 + $0x98] sm:$0xf] %vm642, %v616
  %682 = vst.msk [vmem:[%s3 + $0x9c] sm:$0xf] %vm642, %v617
  %683 = vst.msk [vmem:[%s3 + $0xa0] sm:$0xf] %vm642, %v618
  %684 = vst.msk [vmem:[%s3 + $0xa4] sm:$0xf] %vm642, %v619
  %685 = vst.msk [vmem:[%s3 + $0xa8] sm:$0xf] %vm642, %v620
  %686 = vst.msk [vmem:[%s3 + $0xac] sm:$0xf] %vm642, %v621
  %687 = vst.msk [vmem:[%s3 + $0xb0] sm:$0xf] %vm642, %v622
  %688 = vst.msk [vmem:[%s3 + $0xb4] sm:$0xf] %vm642, %v623
  %689 = vst.msk [vmem:[%s3 + $0xb8] sm:$0xf] %vm642, %v624
  %690 = vst.msk [vmem:[%s3 + $0xbc] sm:$0xf] %vm642, %v625
  %691 = vst.msk [vmem:[%s3 + $0xc0] sm:$0xf] %vm642, %v626
  %692 = vst.msk [vmem:[%s3 + $0xc4] sm:$0xf] %vm642, %v627
  %693 = vst.msk [vmem:[%s3 + $0xc8] sm:$0xf] %vm642, %v628
  %694 = vst.msk [vmem:[%s3 + $0xcc] sm:$0xf] %vm642, %v629
  %695 = vst.msk [vmem:[%s3 + $0xd0] sm:$0xf] %vm642, %v630
  %696 = vst.msk [vmem:[%s3 + $0xd4] sm:$0xf] %vm642, %v631
  %697 = vst.msk [vmem:[%s3 + $0xd8] sm:$0xf] %vm642, %v632
  %698 = vst.msk [vmem:[%s3 + $0xdc] sm:$0xf] %vm642, %v633
  %699 = vst.msk [vmem:[%s3 + $0xe0] sm:$0xf] %vm642, %v634
  %700 = vst.msk [vmem:[%s3 + $0xe4] sm:$0xf] %vm642, %v635
  %701 = vst.msk [vmem:[%s3 + $0xe8] sm:$0xf] %vm642, %v636
  %702 = vst.msk [vmem:[%s3 + $0xec] sm:$0xf] %vm642, %v637
  %703 = vst.msk [vmem:[%s3 + $0xf0] sm:$0xf] %vm642, %v638
  %704 = vst.msk [vmem:[%s3 + $0xf4] sm:$0xf] %vm642, %v639
  %705 = vst.msk [vmem:[%s3 + $0xf8] sm:$0xf] %vm642, %v640
  %706 = vst.msk [vmem:[%s3 + $0xfc] sm:$0xf] %vm642, %v641
  // Predicated region
  $region14: #{tpu_custom_call.1} parent=0 // pred_check
    _
  $region15: #{tpu_custom_call.1} parent=0 // pred_check_branch
    %708 = sbr.rel (0) target = $region17
  $region16: #{tpu_custom_call.1} parent=0 // pred_region
    _
  $region17: #{tpu_custom_call.1} parent=0 // pred_fallthru
    _
  // Predicated region
  $region18: #{tpu_custom_call.1} parent=0 // pred_check
    _
  $region19: #{tpu_custom_call.1} parent=0 // pred_check_branch
    %710 = sbr.rel (0) target = $region21
  $region20: #{tpu_custom_call.1} parent=0 // pred_region
    _
  $region21: #{tpu_custom_call.1} parent=0 // pred_fallthru
    _

</llo_original>
